<compile_context>
chip_gen: v7x
topology: tpu7x:2x2x1
jax: 0.10.0
libtpu: 0.0.40
codegen_flags: <defaults>
</compile_context>

<pallas_src>
import functools

import jax
import jax.numpy as jnp
from jax import lax
from jax.experimental import pallas as pl
from jax.experimental.pallas import tpu as pltpu

LANES = 128
SUBLANES = 8
GAMMA = 1.5
ALPHA = 0.25


def _round_up(x, m):
    return -(-x // m) * m


def _device_config():
    """(tile_rows, vmem_limit_bytes) per TPU generation (review-derived)."""
    try:
        kind = jax.devices()[0].device_kind.lower()
    except Exception:
        kind = ""
    if "v7" in kind:                        # 64 MiB physical VMEM/TC, ~3.2 TB/s HBM
        return 4096, 48 * 1024 * 1024
    if "v6" in kind or "trillium" in kind:  # 128 MiB physical, ~1.4 TB/s
        return 4096, 96 * 1024 * 1024
    if "v5 lite" in kind or "v5e" in kind:  # 128 MiB physical, ~0.8 TB/s
        return 2048, 64 * 1024 * 1024
    if "v5" in kind:                        # v5p
        return 4096, 96 * 1024 * 1024
    return 1024, None                       # conservative fallback (v2/v3/v4/unknown)


def _focal_loss_kernel(pred_ref, true_ref, out_ref, *, gamma, alpha,
                       tile_rows, r_cut, l_cut, need_mask):
    i = pl.program_id(1)          # "arbitrary" axis -> output block stays resident

    @pl.when(i == 0)
    def _():
        out_ref[...] = jnp.zeros_like(out_ref)

    x = pred_ref[...].astype(jnp.float32)
    z = true_ref[...].astype(jnp.float32)

    # One shared EUP exp for both the stable BCE-with-logits and the sigmoid.
    e = jnp.exp(-jnp.abs(x))
    d = 1.0 + e
    bce = jnp.maximum(x, 0.0) - x * z + jnp.log(d)

    # sigmoid(x) = where(x>=0, 1, e) / (1+e): approx EUP reciprocal + one
    # Newton-Raphson step (restores full f32 accuracy) instead of a full divide.
    r = pl.reciprocal(d, approx=True)
    r = r * (2.0 - d * r)
    p = jnp.where(x >= 0.0, r, e * r)

    # t = 1 - p_t,  p_t = z*p + (1-z)*(1-p)      (FMA-folded forms)
    t = p + z * (1.0 - 2.0 * p)
    alpha_factor = (1.0 - alpha) + z * (2.0 * alpha - 1.0)

    if gamma == 1.5:
        mod = t * jnp.sqrt(t)                 # t**1.5, exact & NaN-safe at t == 0
    elif gamma == 2.0:
        mod = t * t
    elif gamma == 1.0:
        mod = t
    elif gamma == 0.0:
        mod = jnp.ones_like(t)
    else:
        mod = jnp.where(t > 0.0,
                        jnp.exp(gamma * jnp.log(jnp.maximum(t, 1e-30))),
                        0.0)

    loss = bce * alpha_factor * mod

    if need_mask:
        # Zero every element whose global flat index is >= numel.  Covers the
        # <128-element lane pad, Pallas-DMA garbage rows of a partial last block,
        # and fully out-of-range duplicate steps from the 2-way core split.
        blk = pl.program_id(0) * pl.num_programs(1) + i
        row = blk * tile_rows + lax.broadcasted_iota(jnp.int32, loss.shape, 0)
        valid = row < r_cut
        if l_cut:
            lane = lax.broadcasted_iota(jnp.int32, loss.shape, 1)
            valid = valid | ((row == r_cut) & (lane < l_cut))
        loss = jnp.where(valid, loss, 0.0)

    # Fold (tile_rows, 128) -> (8, 128) with sublane-aligned VPU adds only; the
    # single cross-lane reduce happens once, in the wrapper.
    partial = jnp.sum(loss.reshape(tile_rows // SUBLANES, SUBLANES, LANES), axis=0)
    out_ref[...] += partial.reshape((1, SUBLANES, LANES))


def focal_loss(pred, true, gamma=GAMMA, alpha=ALPHA, reduction="mean"):
    """Focal loss with BCEWithLogitsLoss base (PyTorch FocalLoss.forward).

    pred/true: same-shape tensors (f32 or bf16; bf16 halves HBM traffic, math is
    f32 inside the kernel).  Returns the scalar 'mean' (default) or 'sum'.
    """
    assert pred.shape == true.shape
    if reduction not in ("mean", "sum"):
        # TODO(synk): reduction='none' (full per-element loss output) not implemented.
        raise NotImplementedError("reduction must be 'mean' or 'sum'")

    n_elem = int(pred.size)
    flat_p = pred.reshape(-1)
    flat_t = true.reshape(-1)

    # Lane-dense slab.  Pad (zeros; value irrelevant, masked in-kernel) only when
    # numel is not already a multiple of 128 -- no full-chunk concatenate.
    rem = (-n_elem) % LANES
    if rem:
        flat_p = jnp.pad(flat_p, (0, rem))
        flat_t = jnp.pad(flat_t, (0, rem))
    rows = (n_elem + rem) // LANES
    pred2d = flat_p.reshape(rows, LANES)
    true2d = flat_t.reshape(rows, LANES)

    tile_rows, vmem_limit = _device_config()
    tile_rows = min(tile_rows, _round_up(rows, SUBLANES))

    n_blocks = pl.cdiv(rows, tile_rows)
    num_partials = min(2, n_blocks)          # leading axis: megacore split on v7x
    n_inner = pl.cdiv(n_blocks, num_partials)
    last_blk = n_blocks - 1

    r_cut, l_cut = divmod(n_elem, LANES)     # static: first invalid (row, lane)
    need_mask = (rem != 0) or (rows % tile_rows != 0) or \
                (num_partials * n_inner != n_blocks)

    kernel = functools.partial(
        _focal_loss_kernel, gamma=float(gamma), alpha=float(alpha),
        tile_rows=tile_rows, r_cut=r_cut, l_cut=l_cut, need_mask=need_mask)

    def in_map(c, i):
        # Clamp so duplicate tail steps of the 2-way split stay in bounds; their
        # contribution is zeroed by the in-kernel mask.
        return (jnp.minimum(c * n_inner + i, last_blk), 0)

    cp_kwargs = dict(dimension_semantics=("parallel", "arbitrary"))
    if vmem_limit is not None:
        cp_kwargs["vmem_limit_bytes"] = vmem_limit

    partials = pl.pallas_call(
        kernel,
        out_shape=jax.ShapeDtypeStruct((num_partials, SUBLANES, LANES), jnp.float32),
        grid_spec=pltpu.PrefetchScalarGridSpec(
            num_scalar_prefetch=0,
            grid=(num_partials, n_inner),
            in_specs=[
                pl.BlockSpec((tile_rows, LANES), in_map),
                pl.BlockSpec((tile_rows, LANES), in_map),
            ],
            out_specs=pl.BlockSpec((1, SUBLANES, LANES), lambda c, i: (c, 0, 0)),
        ),
        compiler_params=pltpu.CompilerParams(**cp_kwargs),
    )(pred2d, true2d)

    total = jnp.sum(partials)
    if reduction == "sum":
        return total.astype(jnp.float32)
    return (total / jnp.float32(n_elem)).astype(jnp.float32)


def _focal_loss_ref(pred, true, gamma=GAMMA, alpha=ALPHA):
    pred = pred.astype(jnp.float32)
    true = true.astype(jnp.float32)
    bce = jnp.maximum(pred, 0.0) - pred * true + jnp.log1p(jnp.exp(-jnp.abs(pred)))
    p = jax.nn.sigmoid(pred)
    p_t = true * p + (1 - true) * (1 - p)
    af = true * alpha + (1 - true) * (1 - alpha)
    return jnp.mean(bce * af * (1.0 - p_t) ** gamma)


if __name__ == "__main__":
    key = jax.random.PRNGKey(0)
    k1, k2, k3, k4 = jax.random.split(key, 4)

    # Case 1: typical NCHW detection-head output (numel multiple of 128).
    B, C, H, W = 2, 4, 16, 16
    pred = jax.random.normal(k1, (B, C, H, W), dtype=jnp.float32) * 2.0
    true = (jax.random.uniform(k2, (B, C, H, W)) > 0.7).astype(jnp.float32)
    out = focal_loss(pred, true)
    jax.block_until_ready(out)
    ref = _focal_loss_ref(pred, true)
    assert jnp.allclose(out, ref, rtol=2e-5, atol=1e-6), (out, ref)

    # Case 2: ragged size (numel % 128 != 0) exercising the in-kernel tail mask.
    pred2 = jax.random.normal(k3, (3, 5, 7, 11), dtype=jnp.float32)
    true2 = (jax.random.uniform(k4, (3, 5, 7, 11)) > 0.5).astype(jnp.float32)
    out2 = focal_loss(pred2, true2)
    jax.block_until_ready(out2)
    ref2 = _focal_loss_ref(pred2, true2)
    assert jnp.allclose(out2, ref2, rtol=2e-5, atol=1e-6), (out2, ref2)

    print("KERNEL_OK")
</pallas_src>

<mosaic_0001>
module attributes {stable_mosaic.version = 11 : i64} {
  func.func @_focal_loss_kernel(%arg0: i32, %arg1: i32, %arg2: memref<16x128xf32, #tpu.memory_space<vmem>>, %arg3: memref<16x128xf32, #tpu.memory_space<vmem>>, %arg4: memref<1x8x128xf32, #tpu.memory_space<vmem>>) attributes {dimension_semantics = [#tpu.dimension_semantics<parallel>, #tpu.dimension_semantics<arbitrary>], iteration_bounds = array<i64: 1, 1>, scalar_prefetch = 0 : i64, scratch_operands = 0 : i64, tpu.core_type = #tpu.core_type<tc>, window_params = [{transform_indices = @transform_0, window_bounds = array<i64: 16, 128>}, {transform_indices = @transform_1, window_bounds = array<i64: 16, 128>}, {transform_indices = @transform_2, window_bounds = array<i64: 1, 8, 128>}]} {
    %c0_i32 = arith.constant 0 : i32
    %0 = arith.cmpi eq, %arg1, %c0_i32 : i32
    %1 = arith.extui %0 : i1 to i32
    %c0_i32_0 = arith.constant 0 : i32
    %2 = arith.cmpi ne, %1, %c0_i32_0 : i32
    scf.if %2 {
      %cst_19 = arith.constant 0.000000e+00 : f32
      %46 = vector.broadcast %cst_19 : f32 to vector<1x8x128xf32>
      %c0_20 = arith.constant 0 : index
      %c0_21 = arith.constant 0 : index
      %c0_22 = arith.constant 0 : index
      %47 = vector.load %arg4[%c0_20, %c0_21, %c0_22] : memref<1x8x128xf32, #tpu.memory_space<vmem>>, vector<1x8x128xf32>
      tpu.vector_store %arg4[%c0_20, %c0_21, %c0_22], %46 {strides = array<i32>} : memref<1x8x128xf32, #tpu.memory_space<vmem>>, vector<1x8x128xf32>,
    } else {
    }
    %c0 = arith.constant 0 : index
    %c0_1 = arith.constant 0 : index
    %3 = vector.load %arg2[%c0, %c0_1] : memref<16x128xf32, #tpu.memory_space<vmem>>, vector<16x128xf32>
    %c0_2 = arith.constant 0 : index
    %c0_3 = arith.constant 0 : index
    %4 = vector.load %arg3[%c0_2, %c0_3] : memref<16x128xf32, #tpu.memory_space<vmem>>, vector<16x128xf32>
    %5 = math.absf %3 : vector<16x128xf32>
    %cst = arith.constant 0.000000e+00 : f32
    %6 = vector.broadcast %cst : f32 to vector<16x128xf32>
    %7 = arith.subf %6, %5 : vector<16x128xf32>
    %8 = math.exp %7 : vector<16x128xf32>
    %cst_4 = arith.constant 1.000000e+00 : f32
    %9 = vector.broadcast %cst_4 : f32 to vector<16x128xf32>
    %10 = arith.addf %9, %8 : vector<16x128xf32>
    %cst_5 = arith.constant 0.000000e+00 : f32
    %11 = vector.broadcast %cst_5 : f32 to vector<16x128xf32>
    %12 = arith.maximumf %3, %11 : vector<16x128xf32>
    %13 = arith.mulf %3, %4 : vector<16x128xf32>
    %14 = arith.subf %12, %13 : vector<16x128xf32>
    %15 = math.log %10 : vector<16x128xf32>
    %16 = arith.addf %14, %15 : vector<16x128xf32>
    %17 = tpu.reciprocal %10 {approx = true} : vector<16x128xf32> -> vector<16x128xf32>
    %18 = arith.mulf %10, %17 : vector<16x128xf32>
    %cst_6 = arith.constant 2.000000e+00 : f32
    %19 = vector.broadcast %cst_6 : f32 to vector<16x128xf32>
    %20 = arith.subf %19, %18 : vector<16x128xf32>
    %21 = arith.mulf %17, %20 : vector<16x128xf32>
    %cst_7 = arith.constant 0.000000e+00 : f32
    %22 = vector.broadcast %cst_7 : f32 to vector<16x128xf32>
    %23 = arith.cmpf oge, %3, %22 : vector<16x128xf32>
    %24 = arith.mulf %8, %21 : vector<16x128xf32>
    %25 = arith.select %23, %21, %24 : vector<16x128xi1>, vector<16x128xf32>
    %cst_8 = arith.constant 2.000000e+00 : f32
    %26 = vector.broadcast %cst_8 : f32 to vector<16x128xf32>
    %27 = arith.mulf %26, %25 : vector<16x128xf32>
    %cst_9 = arith.constant 1.000000e+00 : f32
    %28 = vector.broadcast %cst_9 : f32 to vector<16x128xf32>
    %29 = arith.subf %28, %27 : vector<16x128xf32>
    %30 = arith.mulf %4, %29 : vector<16x128xf32>
    %31 = arith.addf %25, %30 : vector<16x128xf32>
    %cst_10 = arith.constant -5.000000e-01 : f32
    %32 = vector.broadcast %cst_10 : f32 to vector<16x128xf32>
    %33 = arith.mulf %4, %32 : vector<16x128xf32>
    %cst_11 = arith.constant 7.500000e-01 : f32
    %34 = vector.broadcast %cst_11 : f32 to vector<16x128xf32>
    %35 = arith.addf %34, %33 : vector<16x128xf32>
    %36 = math.sqrt %31 : vector<16x128xf32>
    %37 = arith.mulf %31, %36 : vector<16x128xf32>
    %38 = arith.mulf %16, %35 : vector<16x128xf32>
    %39 = arith.mulf %38, %37 : vector<16x128xf32>
    %40 = vector.shape_cast %39 : vector<16x128xf32> to vector<2x8x128xf32>
    %cst_12 = arith.constant dense<0.000000e+00> : vector<8x128xf32>
    %41 = vector.multi_reduction <add>, %40, %cst_12 [0] : vector<2x8x128xf32> to vector<8x128xf32>
    %c0_13 = arith.constant 0 : index
    %c0_14 = arith.constant 0 : index
    %c0_15 = arith.constant 0 : index
    %42 = vector.load %arg4[%c0_13, %c0_14, %c0_15] : memref<1x8x128xf32, #tpu.memory_space<vmem>>, vector<1x8x128xf32>
    %43 = vector.shape_cast %41 : vector<8x128xf32> to vector<1x8x128xf32>
    %44 = arith.addf %42, %43 : vector<1x8x128xf32>
    %c0_16 = arith.constant 0 : index
    %c0_17 = arith.constant 0 : index
    %c0_18 = arith.constant 0 : index
    %45 = vector.load %arg4[%c0_16, %c0_17, %c0_18] : memref<1x8x128xf32, #tpu.memory_space<vmem>>, vector<1x8x128xf32>
    tpu.vector_store %arg4[%c0_16, %c0_17, %c0_18], %44 {strides = array<i32>} : memref<1x8x128xf32, #tpu.memory_space<vmem>>, vector<1x8x128xf32>,
    return
  }
  func.func @transform_0(%arg0: i32, %arg1: i32) -> (i32, i32) {
    %c1_i32 = arith.constant 1 : i32
    %0 = arith.muli %arg0, %c1_i32 : i32
    %1 = arith.addi %0, %arg1 : i32
    %c0_i32 = arith.constant 0 : i32
    %2 = arith.minsi %1, %c0_i32 : i32
    %c0_i32_0 = arith.constant 0 : i32
    %c0_i32_1 = arith.constant 0 : i32
    return %2, %c0_i32_0 : i32, i32
  }
  func.func @transform_1(%arg0: i32, %arg1: i32) -> (i32, i32) {
    %c1_i32 = arith.constant 1 : i32
    %0 = arith.muli %arg0, %c1_i32 : i32
    %1 = arith.addi %0, %arg1 : i32
    %c0_i32 = arith.constant 0 : i32
    %2 = arith.minsi %1, %c0_i32 : i32
    %c0_i32_0 = arith.constant 0 : i32
    %c0_i32_1 = arith.constant 0 : i32
    return %2, %c0_i32_0 : i32, i32
  }
  func.func @transform_2(%arg0: i32, %arg1: i32) -> (i32, i32, i32) {
    %c0_i32 = arith.constant 0 : i32
    %c0_i32_0 = arith.constant 0 : i32
    %c0_i32_1 = arith.constant 0 : i32
    return %arg0, %c0_i32, %c0_i32_0 : i32, i32, i32
  }
}

</mosaic_0001>

<llo_original>
// kernel: tpu_custom_call.1
$region0: #{tpu_custom_call.1}
  #allocation0 [shape = 'u32[]', space=smem, size = 0x4, offset = 0x4, fixed_abs, tag = 'smem constant byte address 0x4 - core index']
  #allocation1 [shape = 'u32[144,128]{1,0:T(1,128)}', space=vmem, size = 0x12000, scoped, tag = 'internal scratch']
  %s0 = inlined_call_operand.hbm [shape: f32[16,128], index: 0, kind: input, shape index: {}]
  %s1 = inlined_call_operand.hbm [shape: f32[16,128], index: 1, kind: input, shape index: {}]
  %s2 = inlined_call_operand.hbm [shape: f32[1,8,128], index: 2, kind: output, shape index: {}]
  %s3 = sld [smem:[#allocation0]]
  $region30: #{tpu_custom_call.1} parent=0
    _
  %s5 = ssub.s32 1, %s3
  %s6 = scalar_select 0, %s5, %s3
  $region1: #{tpu_custom_call.1} parent=0
    #allocation2 [shape = 'u8[8192]{0}', space=vmem, size = 0x2000, scoped, tag = 'input window, operand 0, single buffered']
    #allocation3 [shape = 's32[1]{0}', space=sflag, size = 0x4, scoped, tag = 'scoped memory for tpu_custom_call.1']
    #allocation4 [shape = 's32[1]{0}', space=sflag, size = 0x4, scoped, tag = 'scoped memory for tpu_custom_call.1']
    #allocation5 [shape = 'u8[8192]{0}', space=vmem, size = 0x2000, scoped, tag = 'input window, operand 1, single buffered']
    #allocation6 [shape = 's32[1]{0}', space=sflag, size = 0x4, scoped, tag = 'scoped memory for tpu_custom_call.1']
    #allocation7 [shape = 'u8[4096]{0}', space=vmem, size = 0x1000, scoped, tag = 'output window, operand 0, single buffered']
    %7 = vsyncpa [#allocation3], 0
    %8 = vsyncpa [#allocation6], 0
    %9 = vsyncpa [#allocation4], 0
    // Predicated region
    $region2: #{tpu_custom_call.1} parent=1 // pred_check
      _
    $region3: #{tpu_custom_call.1} parent=1 // pred_check_branch
      %11 = sbr.rel (0) target = $region5
    $region4: #{tpu_custom_call.1} parent=1 // pred_region
      %s12 = sadd.s32 0, 0
      %p13 = scmp.lt.s32.totalorder %s12, 0
      %s14 = scalar_select %p13, %s12, 0
      %s15 = smul.u32 2, %s14
      %s17 = ssub.s32 256, 256
      %18 = vsyncadd [#allocation3], %s17
      %s19 = smul.addr %s15, 128
      %s20 = scalar_lea.hbm %s0, %s19
      %s21 = sshll.u32 [#allocation2], 4
      %s22 = int_to_ptr.vmem [resolvable:$true] %s21
      %27 = dma.hbm_to_vmem [thread:$0]  %s20, 256, %s22, [#allocation3], 128, 128, 8
    $region5: #{tpu_custom_call.1} parent=1 // pred_fallthru
      _
    // Predicated region
    $region6: #{tpu_custom_call.1} parent=1 // pred_check
      _
    $region7: #{tpu_custom_call.1} parent=1 // pred_check_branch
      %29 = sbr.rel (0) target = $region9
    $region8: #{tpu_custom_call.1} parent=1 // pred_region
      %s30 = sadd.s32 0, 0
      %p31 = scmp.lt.s32.totalorder %s30, 0
      %s32 = scalar_select %p31, %s30, 0
      %s33 = smul.u32 2, %s32
      %s35 = ssub.s32 256, 256
      %36 = vsyncadd [#allocation6], %s35
      %s37 = smul.addr %s33, 128
      %s38 = scalar_lea.hbm %s1, %s37
      %s39 = sshll.u32 [#allocation5], 4
      %s40 = int_to_ptr.vmem [resolvable:$true] %s39
      %45 = dma.hbm_to_vmem [thread:$0]  %s38, 256, %s40, [#allocation6], 128, 128, 8
    $region9: #{tpu_custom_call.1} parent=1 // pred_fallthru
      _
    // Predicated region
    $region10: #{tpu_custom_call.1} parent=1 // pred_check
      _
    $region11: #{tpu_custom_call.1} parent=1 // pred_check_branch
      %47 = sbr.rel (0) target = $region13
    $region12: #{tpu_custom_call.1} parent=1 // pred_region
      %48 = dma.done [#allocation3], 256
    $region13: #{tpu_custom_call.1} parent=1 // pred_fallthru
      _
    // Predicated region
    $region14: #{tpu_custom_call.1} parent=1 // pred_check
      _
    $region15: #{tpu_custom_call.1} parent=1 // pred_check_branch
      %50 = sbr.rel (0) target = $region17
    $region16: #{tpu_custom_call.1} parent=1 // pred_region
      %51 = dma.done [#allocation6], 256
    $region17: #{tpu_custom_call.1} parent=1 // pred_fallthru
      _
    %s52 = sadd.s32 0, 0
    %p53 = scmp.lt.s32.totalorder %s52, 0
    %s54 = scalar_select %p53, %s52, 0
    %s55 = smul.u32 2, %s54
    %s56 = sadd.s32 0, 0
    %p57 = scmp.lt.s32.totalorder %s56, 0
    %s58 = scalar_select %p57, %s56, 0
    %s59 = smul.u32 2, %s58
    %p60 = scmp.eq.s32.totalorder 0, 0
    // Predicated region
    $region18: #{tpu_custom_call.1} parent=1 // pred_check
      %p61 = pneg %p60
    $region19: #{tpu_custom_call.1} parent=1 // pred_check_branch
      %63 = sbr.rel (%p61) target = $region21
    $region20: #{tpu_custom_call.1} parent=1 // pred_region
      %64 = vst [vmem:[#allocation7] sm:$0xff] 0.0
    $region21: #{tpu_custom_call.1} parent=1 // pred_fallthru
      _
    %v65 = vld [vmem:[#allocation2] sm:$0xff]
    %v66 = vld [vmem:[#allocation2 + $0x8] sm:$0xff]
    %v67 = vld [vmem:[#allocation5] sm:$0xff]
    %v68 = vld [vmem:[#allocation5 + $0x8] sm:$0xff]
    %v69 = vand.u32 2147483647, %v65
    %v70 = vand.u32 2147483647, %v66
    %v71 = vsub.f32 0.0, %v69
    %v72 = vsub.f32 0.0, %v70
    %v73 = vmul.f32 %v71, 1.442695
    %v74 = vpow.pop %v73
    %v75 = vmul.f32 %v72, 1.442695
    %v76 = vpow.pop %v75
    %v77 = vadd.f32 %v74, 1.0
    %v78 = vadd.f32 %v76, 1.0
    %v79 = vmax.f32 %v65, 0.0
    %v80 = vmax.f32 %v66, 0.0
    %v81 = vmul.f32 %v65, %v67
    %v82 = vmul.f32 %v66, %v68
    %v83 = vsub.f32 %v79, %v81
    %v84 = vsub.f32 %v80, %v82
    %v85 = vlog2.pop %v77
    %v86 = vmul.f32 %v85, 0.6931472
    %v87 = vlog2.pop %v78
    %v88 = vmul.f32 %v87, 0.6931472
    %v89 = vadd.f32 %v83, %v86
    %v90 = vadd.f32 %v84, %v88
    %v91 = vrcp.pop %v77
    %v92 = vrcp.pop %v78
    %v93 = vmul.f32 %v77, %v91
    %v94 = vmul.f32 %v78, %v92
    %v95 = vsub.f32 2.0, %v93
    %v96 = vsub.f32 2.0, %v94
    %v97 = vmul.f32 %v91, %v95
    %v98 = vmul.f32 %v92, %v96
    %vm99 = vcmp.ge.f32.partialorder %v65, 0.0
    %vm100 = vcmp.ge.f32.partialorder %v66, 0.0
    %v101 = vmul.f32 %v74, %v97
    %v102 = vmul.f32 %v76, %v98
    %v103 = vsel %vm99, %v97, %v101
    %v104 = vsel %vm100, %v98, %v102
    %v105 = vmul.f32 %v103, 2.0
    %v106 = vmul.f32 %v104, 2.0
    %v107 = vsub.f32 1.0, %v105
    %v108 = vsub.f32 1.0, %v106
    %v109 = vmul.f32 %v67, %v107
    %v110 = vmul.f32 %v68, %v108
    %v111 = vadd.f32 %v103, %v109
    %v112 = vadd.f32 %v104, %v110
    %v113 = vmul.f32 %v67, -0.5
    %v114 = vmul.f32 %v68, -0.5
    %v115 = vadd.f32 %v113, 0.75
    %v116 = vadd.f32 %v114, 0.75
    %v117 = vrsqrt.pop %v111
    %v118 = vmul.f32 %v111, %v117
    %vm119 = vcmp.eq.f32.partialorder %v111, inf
    %v120 = vsel %vm119, %v111, %v118
    %vm121 = vcmp.eq.f32.partialorder %v111, 0.0
    %v122 = vand.u32 %v111, 2147483648
    %v123 = vsel %vm121, %v122, %v120
    %v124 = vrsqrt.pop %v112
    %v125 = vmul.f32 %v112, %v124
    %vm126 = vcmp.eq.f32.partialorder %v112, inf
    %v127 = vsel %vm126, %v112, %v125
    %vm128 = vcmp.eq.f32.partialorder %v112, 0.0
    %v129 = vand.u32 %v112, 2147483648
    %v130 = vsel %vm128, %v129, %v127
    %v131 = vmul.f32 %v111, %v123
    %v132 = vmul.f32 %v112, %v130
    %v133 = vmul.f32 %v89, %v115
    %v134 = vmul.f32 %v90, %v116
    %v135 = vmul.f32 %v133, %v131
    %v136 = vmul.f32 %v134, %v132
    %v137 = vadd.f32 %v135, %v136
    %v138 = vld [vmem:[#allocation7] sm:$0xff]
    %v139 = vadd.f32 %v138, %v137
    %140 = vst [vmem:[#allocation7] sm:$0xff] %v139
    // Predicated region
    $region22: #{tpu_custom_call.1} parent=1 // pred_check
      _
    $region23: #{tpu_custom_call.1} parent=1 // pred_check_branch
      %142 = sbr.rel (0) target = $region25
    $region24: #{tpu_custom_call.1} parent=1 // pred_region
      %s144 = ssub.s32 128, 128
      %145 = vsyncadd [#allocation4], %s144
      %s147 = sshll.u32 [#allocation7], 4
      %s148 = int_to_ptr.vmem [resolvable:$true] %s147
      %150 = dma.vmem_to_hbm [thread:$0]  %s148, 128, %s2, [#allocation4]
    $region25: #{tpu_custom_call.1} parent=1 // pred_fallthru
      _
    // Predicated region
    $region26: #{tpu_custom_call.1} parent=1 // pred_check
      _
    $region27: #{tpu_custom_call.1} parent=1 // pred_check_branch
      %152 = sbr.rel (0) target = $region29
    $region28: #{tpu_custom_call.1} parent=1 // pred_region
      %153 = dma.done [#allocation4], 128
    $region29: #{tpu_custom_call.1} parent=1 // pred_fallthru
      _
    %154 = vsyncpa [#allocation3], 1
    %155 = vsyncpa [#allocation6], 1
    %156 = vsyncpa [#allocation4], 1

</llo_original>
